<compile_context>
chip_gen: v6e
topology: v6e:2x2x1
jax: 0.10.0
libtpu: 0.0.40
codegen_flags: <defaults>
</compile_context>

<pallas_src>
import jax
import jax.numpy as jnp
from jax import lax
from jax.experimental import pallas as pl
from jax.experimental.pallas import tpu as pltpu


def make_hnn_kernel(matmul_dtype):
    """Kernel factory; matmul_dtype is the MXU operand dtype (bf16 or f32)."""

    def hnn_kernel(x_ref, w1_ref, w2_ref, w3_ref, bc_ref, o_ref):
        # x_ref : (TB, 36)  original row-major input block
        # w1    : (H, 36)   w2, w3: (H, H)       (matmul_dtype)
        # bc    : (H, 4)    columns = [b1 | b2 | b3 | w4]   (f32)
        # o_ref : (1, TB)   lane-dense output slab (f32)
        x = x_ref[...].astype(matmul_dtype)

        b1 = bc_ref[:, 0:1]
        b2 = bc_ref[:, 1:2]
        b3 = bc_ref[:, 2:3]
        w4 = bc_ref[:, 3:4]

        # Layer 1: w1 @ x^T  -> (H, TB).  Contracting the last dims of both
        # operands (the q@k.T pattern) puts batch on the lane axis without any
        # wrapper-side transpose of y.
        z1 = lax.dot_general(w1_ref[...], x, (((1,), (1,)), ((), ())),
                             preferred_element_type=jnp.float32)
        h = jnp.tanh(z1 + b1)                                   # f32 VPU/EUP

        # Layers 2/3: (H, H) @ (H, TB) -> (H, TB), bf16 operands, f32 acc.
        z2 = jnp.dot(w2_ref[...], h.astype(matmul_dtype),
                     preferred_element_type=jnp.float32)
        h = jnp.tanh(z2 + b2)

        z3 = jnp.dot(w3_ref[...], h.astype(matmul_dtype),
                     preferred_element_type=jnp.float32)
        h = jnp.tanh(z3 + b3)

        # Final Linear(H, 1, bias=None): elementwise multiply + sublane
        # reduction (avoids an M=1 MXU matmul, keeps the output lane-dense).
        o_ref[...] = jnp.sum(h * w4, axis=0, keepdims=True).astype(o_ref.dtype)

    return hnn_kernel


def _pick_tb(B, tb_max=8192):
    """Batch tile: multiple of 128, <= tb_max, aiming for an even tile count
    >= 2 (so both v7x TensorCores get work via the 'parallel' grid axis)."""
    tb_max = max(128, (int(tb_max) // 128) * 128)
    n_tiles = max(2, pl.cdiv(B, tb_max))
    if n_tiles % 2:
        n_tiles += 1
    tb = 128 * pl.cdiv(B, 128 * n_tiles)
    return max(int(tb), 128)


def hnn_forward(y, params, *, tb=None, tb_max=8192, use_bf16_matmul=True):
    """Pallas HNN forward.

    y: [B, 36] float32 -> [B, 1] float32.
    params: PyTorch-layout tensors (w: (out_features, in_features), b: (out,)).
    tb: batch tile (multiple of 128); picked automatically if None.
    use_bf16_matmul: cast matmul operands to bf16 (f32 accumulation).
    """
    w1, b1, w2, b2, w3, b3, w4 = params
    B, D_in = y.shape
    H = w1.shape[0]

    if tb is None:
        tb = _pick_tb(B, tb_max)
    assert tb % 128 == 0, "batch tile must be a multiple of 128 (lane width)"
    num_tiles = pl.cdiv(B, tb)

    mm_dtype = jnp.bfloat16 if use_bf16_matmul else jnp.float32
    w1c = w1.astype(mm_dtype)
    w2c = w2.astype(mm_dtype)
    w3c = w3.astype(mm_dtype)
    # Pack the three biases and the final weight column into one (H, 4) array
    # (one resident BlockSpec/DMA instead of four tiny lane-padded ones).
    bc = jnp.stack([b1, b2, b3, w4.reshape(-1)], axis=1).astype(jnp.float32)

    def full(shape):
        return pl.BlockSpec(shape, lambda i: (0,) * len(shape))

    weight_bytes = sum(int(a.size) * a.dtype.itemsize for a in (w1c, w2c, w3c, bc))
    cost = pl.CostEstimate(
        flops=int(2 * B * (D_in * H + 2 * H * H + H)),
        transcendentals=int(3 * B * H),
        bytes_accessed=int(y.size * y.dtype.itemsize + 4 * B + weight_bytes),
    )

    out = pl.pallas_call(
        make_hnn_kernel(mm_dtype),
        out_shape=jax.ShapeDtypeStruct((1, B), jnp.float32),
        grid_spec=pltpu.PrefetchScalarGridSpec(
            num_scalar_prefetch=0,
            grid=(num_tiles,),
            in_specs=[
                pl.BlockSpec((tb, D_in), lambda i: (i, 0)),     # y tile (no pad)
                full(w1c.shape),
                full(w2c.shape),
                full(w3c.shape),
                full(bc.shape),
            ],
            out_specs=pl.BlockSpec((1, tb), lambda i: (0, i)),
        ),
        compiler_params=pltpu.CompilerParams(
            dimension_semantics=("parallel",)),
        cost_estimate=cost,
    )(y, w1c, w2c, w3c, bc)

    # (1, B) row-major flattens identically to (B, 1): free reshape, no slice
    # needed because Pallas drops out-of-bounds writes of the ragged tail.
    return out.reshape(B, 1)


def init_params(key, n_hidden):
    """Deterministic init mirroring the module: weights ~ N(0, 0.1), biases 0.

    Returned in PyTorch layout: weight (out_features, in_features), bias (out,).
    """
    k1, k2, k3, k4 = jax.random.split(key, 4)
    w1 = 0.1 * jax.random.normal(k1, (n_hidden, 36), jnp.float32)
    b1 = jnp.zeros((n_hidden,), jnp.float32)
    w2 = 0.1 * jax.random.normal(k2, (n_hidden, n_hidden), jnp.float32)
    b2 = jnp.zeros((n_hidden,), jnp.float32)
    w3 = 0.1 * jax.random.normal(k3, (n_hidden, n_hidden), jnp.float32)
    b3 = jnp.zeros((n_hidden,), jnp.float32)
    w4 = 0.1 * jax.random.normal(k4, (1, n_hidden), jnp.float32)  # no bias
    return (w1, b1, w2, b2, w3, b3, w4)


def hnn_reference(y, params):
    w1, b1, w2, b2, w3, b3, w4 = params
    h = jnp.tanh(y @ w1.T + b1)
    h = jnp.tanh(h @ w2.T + b2)
    h = jnp.tanh(h @ w3.T + b3)
    return h @ w4.T


if __name__ == "__main__":
    key = jax.random.PRNGKey(0)
    k_param, k_data = jax.random.split(key)

    n_hidden = 32
    batch = 300  # not a multiple of 128 -> exercises the ragged-tail path

    params = init_params(k_param, n_hidden)
    y = jax.random.normal(k_data, (batch, 36), jnp.float32)

    ref = jax.block_until_ready(hnn_reference(y, params))

    # Exact f32-operand path (matches the reference tightly).
    out_f32 = jax.block_until_ready(
        hnn_forward(y, params, use_bf16_matmul=False))
    assert out_f32.shape == (batch, 1)
    assert jnp.allclose(out_f32, ref, atol=1e-5, rtol=1e-5), "f32 mismatch"

    # Fast bf16-operand path (f32 accumulation): loose tolerance by design.
    out_bf16 = jax.block_until_ready(hnn_forward(y, params))
    assert out_bf16.shape == (batch, 1)
    assert jnp.allclose(out_bf16, ref, atol=5e-2, rtol=5e-2), "bf16 mismatch"

    # TODO(synk): `derivative`/`sympletic` need autograd w.r.t. the input;
    # they would be implemented via jax.grad around this forward, not in-kernel.
    print("KERNEL_OK")
</pallas_src>

<mosaic_0001>
module attributes {stable_mosaic.version = 11 : i64} {
  func.func @hnn_kernel(%arg0: i32, %arg1: memref<256x36xf32, #tpu.memory_space<vmem>>, %arg2: memref<32x36xf32, #tpu.memory_space<vmem>>, %arg3: memref<32x32xf32, #tpu.memory_space<vmem>>, %arg4: memref<32x32xf32, #tpu.memory_space<vmem>>, %arg5: memref<32x4xf32, #tpu.memory_space<vmem>>, %arg6: memref<1x256xf32, #tpu.memory_space<vmem>>) attributes {dimension_semantics = [#tpu.dimension_semantics<parallel>], iteration_bounds = array<i64: 2>, scalar_prefetch = 0 : i64, scratch_operands = 0 : i64, tpu.core_type = #tpu.core_type<tc>, window_params = [{transform_indices = @transform_0, window_bounds = array<i64: 256, 36>}, {pipeline_mode = #tpu.pipeline_mode<synchronous>, transform_indices = @transform_1, window_bounds = array<i64: 32, 36>}, {pipeline_mode = #tpu.pipeline_mode<synchronous>, transform_indices = @transform_2, window_bounds = array<i64: 32, 32>}, {pipeline_mode = #tpu.pipeline_mode<synchronous>, transform_indices = @transform_3, window_bounds = array<i64: 32, 32>}, {pipeline_mode = #tpu.pipeline_mode<synchronous>, transform_indices = @transform_4, window_bounds = array<i64: 32, 4>}, {transform_indices = @transform_5, window_bounds = array<i64: 1, 256>}]} {
    %c0 = arith.constant 0 : index
    %c0_0 = arith.constant 0 : index
    %0 = vector.load %arg1[%c0, %c0_0] : memref<256x36xf32, #tpu.memory_space<vmem>>, vector<256x36xf32>
    %c0_1 = arith.constant 0 : index
    %c0_2 = arith.constant 0 : index
    %1 = vector.load %arg5[%c0_1, %c0_2] : memref<32x4xf32, #tpu.memory_space<vmem>>, vector<32x1xf32>
    %c0_3 = arith.constant 0 : index
    %c1 = arith.constant 1 : index
    %2 = vector.load %arg5[%c0_3, %c1] : memref<32x4xf32, #tpu.memory_space<vmem>>, vector<32x1xf32>
    %c0_4 = arith.constant 0 : index
    %c2 = arith.constant 2 : index
    %3 = vector.load %arg5[%c0_4, %c2] : memref<32x4xf32, #tpu.memory_space<vmem>>, vector<32x1xf32>
    %c0_5 = arith.constant 0 : index
    %c3 = arith.constant 3 : index
    %4 = vector.load %arg5[%c0_5, %c3] : memref<32x4xf32, #tpu.memory_space<vmem>>, vector<32x1xf32>
    %c0_6 = arith.constant 0 : index
    %c0_7 = arith.constant 0 : index
    %5 = vector.load %arg2[%c0_6, %c0_7] : memref<32x36xf32, #tpu.memory_space<vmem>>, vector<32x36xf32>
    %cst = arith.constant dense<0.000000e+00> : vector<32x256xf32>
    %6 = tpu.matmul %5, %0, %cst {dimension_numbers = #tpu.dot_dimension_numbers<[1], [1], [0], [0], [0, 0, 1, 0], [], []>} : vector<32x36xf32>, vector<256x36xf32>, vector<32x256xf32> -> vector<32x256xf32>
    %7 = vector.broadcast %1 : vector<32x1xf32> to vector<32x256xf32>
    %8 = arith.addf %6, %7 : vector<32x256xf32>
    %9 = math.tanh %8 : vector<32x256xf32>
    %c0_8 = arith.constant 0 : index
    %c0_9 = arith.constant 0 : index
    %10 = vector.load %arg3[%c0_8, %c0_9] : memref<32x32xf32, #tpu.memory_space<vmem>>, vector<32x32xf32>
    %cst_10 = arith.constant dense<0.000000e+00> : vector<32x256xf32>
    %11 = tpu.matmul %10, %9, %cst_10 {dimension_numbers = #tpu.dot_dimension_numbers<[1], [0], [0], [1], [0, 0, 1, 1], [], []>} : vector<32x32xf32>, vector<32x256xf32>, vector<32x256xf32> -> vector<32x256xf32>
    %12 = vector.broadcast %2 : vector<32x1xf32> to vector<32x256xf32>
    %13 = arith.addf %11, %12 : vector<32x256xf32>
    %14 = math.tanh %13 : vector<32x256xf32>
    %c0_11 = arith.constant 0 : index
    %c0_12 = arith.constant 0 : index
    %15 = vector.load %arg4[%c0_11, %c0_12] : memref<32x32xf32, #tpu.memory_space<vmem>>, vector<32x32xf32>
    %cst_13 = arith.constant dense<0.000000e+00> : vector<32x256xf32>
    %16 = tpu.matmul %15, %14, %cst_13 {dimension_numbers = #tpu.dot_dimension_numbers<[1], [0], [0], [1], [0, 0, 1, 1], [], []>} : vector<32x32xf32>, vector<32x256xf32>, vector<32x256xf32> -> vector<32x256xf32>
    %17 = vector.broadcast %3 : vector<32x1xf32> to vector<32x256xf32>
    %18 = arith.addf %16, %17 : vector<32x256xf32>
    %19 = math.tanh %18 : vector<32x256xf32>
    %20 = vector.broadcast %4 : vector<32x1xf32> to vector<32x256xf32>
    %21 = arith.mulf %19, %20 : vector<32x256xf32>
    %cst_14 = arith.constant dense<0.000000e+00> : vector<256xf32>
    %22 = vector.multi_reduction <add>, %21, %cst_14 [0] : vector<32x256xf32> to vector<256xf32>
    %23 = vector.shape_cast %22 : vector<256xf32> to vector<1x256xf32>
    %c0_15 = arith.constant 0 : index
    %c0_16 = arith.constant 0 : index
    %24 = vector.load %arg6[%c0_15, %c0_16] : memref<1x256xf32, #tpu.memory_space<vmem>>, vector<1x256xf32>
    tpu.vector_store %arg6[%c0_15, %c0_16], %23 {strides = array<i32>} : memref<1x256xf32, #tpu.memory_space<vmem>>, vector<1x256xf32>,
    return
  }
  func.func @transform_0(%arg0: i32) -> (i32, i32) {
    %c0_i32 = arith.constant 0 : i32
    %c0_i32_0 = arith.constant 0 : i32
    return %arg0, %c0_i32 : i32, i32
  }
  func.func @transform_1(%arg0: i32) -> (i32, i32) {
    %c0_i32 = arith.constant 0 : i32
    %c0_i32_0 = arith.constant 0 : i32
    %c0_i32_1 = arith.constant 0 : i32
    return %c0_i32, %c0_i32_0 : i32, i32
  }
  func.func @transform_2(%arg0: i32) -> (i32, i32) {
    %c0_i32 = arith.constant 0 : i32
    %c0_i32_0 = arith.constant 0 : i32
    %c0_i32_1 = arith.constant 0 : i32
    return %c0_i32, %c0_i32_0 : i32, i32
  }
  func.func @transform_3(%arg0: i32) -> (i32, i32) {
    %c0_i32 = arith.constant 0 : i32
    %c0_i32_0 = arith.constant 0 : i32
    %c0_i32_1 = arith.constant 0 : i32
    return %c0_i32, %c0_i32_0 : i32, i32
  }
  func.func @transform_4(%arg0: i32) -> (i32, i32) {
    %c0_i32 = arith.constant 0 : i32
    %c0_i32_0 = arith.constant 0 : i32
    %c0_i32_1 = arith.constant 0 : i32
    return %c0_i32, %c0_i32_0 : i32, i32
  }
  func.func @transform_5(%arg0: i32) -> (i32, i32) {
    %c0_i32 = arith.constant 0 : i32
    %c0_i32_0 = arith.constant 0 : i32
    return %c0_i32, %arg0 : i32, i32
  }
}

</mosaic_0001>

<llo_original>
// kernel: tpu_custom_call.1
$region0: #{tpu_custom_call.1}
  #allocation0 [shape = 'u32[]', space=smem, size = 0x4, offset = 0x4, fixed_abs, tag = 'smem constant byte address 0x4 - core index']
  #allocation1 [shape = 'u32[144,128]{1,0:T(1,128)}', space=vmem, size = 0x12000, scoped, tag = 'internal scratch']
  %s0 = inlined_call_operand.vmem [shape: f32[300,36], index: 0, kind: input, shape index: {}]
  %s1 = inlined_call_operand.vmem [shape: f32[32,36], index: 1, kind: input, shape index: {}]
  %s2 = inlined_call_operand.vmem [shape: f32[32,32], index: 2, kind: input, shape index: {}]
  %s3 = inlined_call_operand.vmem [shape: f32[32,32], index: 3, kind: input, shape index: {}]
  %s4 = inlined_call_operand.vmem [shape: f32[32,4], index: 4, kind: input, shape index: {}]
  %s5 = inlined_call_operand.hbm [shape: f32[1,300], index: 5, kind: output, shape index: {}]
  %s6 = sld [smem:[#allocation0]]
  $region53: #{tpu_custom_call.1} parent=0
    _
  %s8 = ssub.s32 1, %s6
  %s9 = scalar_select 0, %s8, %s6
  $region1: #{tpu_custom_call.1} parent=0
    #allocation2 [shape = 'u8[2048]{0}', space=vmem, size = 0x800, scoped, tag = 'output window, operand 0']
    #allocation3 [shape = 's32[2]{0}', space=sflag, size = 0x8, scoped, tag = 'scoped memory for tpu_custom_call.1']
    %10 = vsyncpa [#allocation3], 0
    %s11 = scalar_lea.sflag [#allocation3], 1
    %12 = vsyncpa %s11, 0
    loop: start=0, step=1, limit=4
    $region2: #{tpu_custom_call.1} parent=1 // loop_pre_header
      _
    $region3: #{tpu_custom_call.1} parent=1 // loop_header
      %s14 = sphi 0, %s18
      %p15 = scmp.ge.s32.totalorder %s14, 4
      %s24 = sphi 0, %s26
      %s27 = sphi 0, %s24
      %s28 = sphi 0, %s27
      %s44 = sphi 0, %s28
      %s48 = sphi 0, %s48
      %s50 = sphi 0, %s48
      %s51 = sphi 0, %s50
      %s65 = sphi 0, %s51
      %s69 = sphi 0, %s69
      %s71 = sphi 0, %s69
      %s72 = sphi 0, %s71
      %s86 = sphi 0, %s72
      %s90 = sphi 0, %s90
      %s92 = sphi 0, %s90
      %s93 = sphi 0, %s92
      %s107 = sphi 0, %s93
      %s111 = sphi 0, %s111
      %s113 = sphi 0, %s111
      %s114 = sphi 0, %s113
      %s128 = sphi 0, %s114
      %s134 = sphi 0, %s136
      %s137 = sphi 0, %s134
      %s138 = sphi 0, %s137
      %s154 = sphi 0, %s138
    $region4: #{tpu_custom_call.1} parent=1 // loop_header_branch
      %17 = sbr.rel (%p15) target = $region8
    $region5: #{tpu_custom_call.1} parent=1 // loop_body
      %s19 = ssub.s32 %s14, 1
      %s20 = ssub.s32 %s14, 2
      %s21 = sadd.s32 %s14, 1
      %s22 = ssub.s32 %s14, %s21
      %p23 = scmp.eq.s32.totalorder %s22, 0
      %s25 = sadd.s32 %s24, 1
      %s26 = scalar_select %p23, %s24, %s25
      %p29 = pneg %p23
      %p30 = scmp.eq.s32.totalorder %s14, 1
      %p31 = por %p29, %p30
      %p32 = scmp.ne.s32.totalorder %s24, %s27
      %p33 = scmp.eq.s32.totalorder %s14, 0
      %p34 = por %p32, %p33
      %p35 = scmp.ne.s32.totalorder %s24, %s27
      %p36 = scmp.eq.s32.totalorder %s19, 1
      %p37 = por %p35, %p36
      %p38 = scmp.ne.s32.totalorder %s27, %s28
      %p39 = scmp.eq.s32.totalorder %s19, 0
      %p40 = por %p38, %p39
      %p41 = scmp.ne.s32.totalorder %s27, %s28
      %p42 = scmp.eq.s32.totalorder %s20, 1
      %p43 = por %p41, %p42
      %p45 = scmp.ne.s32.totalorder %s28, %s44
      %p46 = scmp.eq.s32.totalorder %s20, 0
      %p47 = por %p45, %p46
      %s49 = sadd.s32 %s48, 1
      %p52 = scmp.eq.s32.totalorder %s14, 1
      %p53 = scmp.ne.s32.totalorder %s48, %s50
      %p54 = scmp.eq.s32.totalorder %s14, 0
      %p55 = por %p53, %p54
      %p56 = scmp.ne.s32.totalorder %s48, %s50
      %p57 = scmp.eq.s32.totalorder %s19, 1
      %p58 = por %p56, %p57
      %p59 = scmp.ne.s32.totalorder %s50, %s51
      %p60 = scmp.eq.s32.totalorder %s19, 0
      %p61 = por %p59, %p60
      %p62 = scmp.ne.s32.totalorder %s50, %s51
      %p63 = scmp.eq.s32.totalorder %s20, 1
      %p64 = por %p62, %p63
      %p66 = scmp.ne.s32.totalorder %s51, %s65
      %p67 = scmp.eq.s32.totalorder %s20, 0
      %p68 = por %p66, %p67
      %s70 = sadd.s32 %s69, 1
      %p73 = scmp.eq.s32.totalorder %s14, 1
      %p74 = scmp.ne.s32.totalorder %s69, %s71
      %p75 = scmp.eq.s32.totalorder %s14, 0
      %p76 = por %p74, %p75
      %p77 = scmp.ne.s32.totalorder %s69, %s71
      %p78 = scmp.eq.s32.totalorder %s19, 1
      %p79 = por %p77, %p78
      %p80 = scmp.ne.s32.totalorder %s71, %s72
      %p81 = scmp.eq.s32.totalorder %s19, 0
      %p82 = por %p80, %p81
      %p83 = scmp.ne.s32.totalorder %s71, %s72
      %p84 = scmp.eq.s32.totalorder %s20, 1
      %p85 = por %p83, %p84
      %p87 = scmp.ne.s32.totalorder %s72, %s86
      %p88 = scmp.eq.s32.totalorder %s20, 0
      %p89 = por %p87, %p88
      %s91 = sadd.s32 %s90, 1
      %p94 = scmp.eq.s32.totalorder %s14, 1
      %p95 = scmp.ne.s32.totalorder %s90, %s92
      %p96 = scmp.eq.s32.totalorder %s14, 0
      %p97 = por %p95, %p96
      %p98 = scmp.ne.s32.totalorder %s90, %s92
      %p99 = scmp.eq.s32.totalorder %s19, 1
      %p100 = por %p98, %p99
      %p101 = scmp.ne.s32.totalorder %s92, %s93
      %p102 = scmp.eq.s32.totalorder %s19, 0
      %p103 = por %p101, %p102
      %p104 = scmp.ne.s32.totalorder %s92, %s93
      %p105 = scmp.eq.s32.totalorder %s20, 1
      %p106 = por %p104, %p105
      %p108 = scmp.ne.s32.totalorder %s93, %s107
      %p109 = scmp.eq.s32.totalorder %s20, 0
      %p110 = por %p108, %p109
      %s112 = sadd.s32 %s111, 1
      %p115 = scmp.eq.s32.totalorder %s14, 1
      %p116 = scmp.ne.s32.totalorder %s111, %s113
      %p117 = scmp.eq.s32.totalorder %s14, 0
      %p118 = por %p116, %p117
      %p119 = scmp.ne.s32.totalorder %s111, %s113
      %p120 = scmp.eq.s32.totalorder %s19, 1
      %p121 = por %p119, %p120
      %p122 = scmp.ne.s32.totalorder %s113, %s114
      %p123 = scmp.eq.s32.totalorder %s19, 0
      %p124 = por %p122, %p123
      %p125 = scmp.ne.s32.totalorder %s113, %s114
      %p126 = scmp.eq.s32.totalorder %s20, 1
      %p127 = por %p125, %p126
      %p129 = scmp.ne.s32.totalorder %s114, %s128
      %p130 = scmp.eq.s32.totalorder %s20, 0
      %p131 = por %p129, %p130
      %s132 = ssub.s32 %s14, %s21
      %p133 = scmp.eq.s32.totalorder %s132, 0
      %s135 = sadd.s32 %s134, 1
      %s136 = scalar_select %p133, %s134, %s135
      %p139 = pneg %p133
      %p140 = scmp.eq.s32.totalorder %s14, 1
      %p141 = por %p139, %p140
      %p142 = scmp.ne.s32.totalorder %s134, %s137
      %p143 = scmp.eq.s32.totalorder %s14, 0
      %p144 = por %p142, %p143
      %p145 = scmp.ne.s32.totalorder %s134, %s137
      %p146 = scmp.eq.s32.totalorder %s19, 1
      %p147 = por %p145, %p146
      %p148 = scmp.ne.s32.totalorder %s137, %s138
      %p149 = scmp.eq.s32.totalorder %s19, 0
      %p150 = por %p148, %p149
      %p151 = scmp.ne.s32.totalorder %s137, %s138
      %p152 = scmp.eq.s32.totalorder %s20, 1
      %p153 = por %p151, %p152
      %p155 = scmp.ne.s32.totalorder %s138, %s154
      %p156 = scmp.eq.s32.totalorder %s20, 0
      %p157 = por %p155, %p156
      %p158 = scmp.le.s32.totalorder 1, %s14
      %p159 = scmp.lt.s32.totalorder %s14, 3
      %p160 = pnand %p158, %p159
      %p161 = pneg %p160
      // Predicated region
      $region9: #{tpu_custom_call.1} parent=5 // pred_check
        _
      $region10: #{tpu_custom_call.1} parent=5 // pred_check_branch
        %163 = sbr.rel (%p160) target = $region12
      $region11: #{tpu_custom_call.1} parent=5 // pred_region
        %s164 = ssub.s32 %s14, 1
        // Predicated region
        $region13: #{tpu_custom_call.1} parent=11 // pred_check
          %p165 = pneg %p61
        $region14: #{tpu_custom_call.1} parent=11 // pred_check_branch
          %167 = sbr.rel (%p165) target = $region16
        $region15: #{tpu_custom_call.1} parent=11 // pred_region
          _
        $region16: #{tpu_custom_call.1} parent=11 // pred_fallthru
          _
        // Predicated region
        $region17: #{tpu_custom_call.1} parent=11 // pred_check
          %p168 = pneg %p82
        $region18: #{tpu_custom_call.1} parent=11 // pred_check_branch
          %170 = sbr.rel (%p168) target = $region20
        $region19: #{tpu_custom_call.1} parent=11 // pred_region
          _
        $region20: #{tpu_custom_call.1} parent=11 // pred_fallthru
          _
        // Predicated region
        $region21: #{tpu_custom_call.1} parent=11 // pred_check
          %p171 = pneg %p103
        $region22: #{tpu_custom_call.1} parent=11 // pred_check_branch
          %173 = sbr.rel (%p171) target = $region24
        $region23: #{tpu_custom_call.1} parent=11 // pred_region
          _
        $region24: #{tpu_custom_call.1} parent=11 // pred_fallthru
          _
        // Predicated region
        $region25: #{tpu_custom_call.1} parent=11 // pred_check
          %p174 = pneg %p124
        $region26: #{tpu_custom_call.1} parent=11 // pred_check_branch
          %176 = sbr.rel (%p174) target = $region28
        $region27: #{tpu_custom_call.1} parent=11 // pred_region
          _
        $region28: #{tpu_custom_call.1} parent=11 // pred_fallthru
          _
      $region12: #{tpu_custom_call.1} parent=5 // pred_fallthru
        _
      %p177 = scmp.lt.s32.totalorder %s14, 2
      // Predicated region
      $region29: #{tpu_custom_call.1} parent=5 // pred_check
        %p178 = pneg %p177
      $region30: #{tpu_custom_call.1} parent=5 // pred_check_branch
        %180 = sbr.rel (%p178) target = $region32
      $region31: #{tpu_custom_call.1} parent=5 // pred_region
        // Predicated region
        $region33: #{tpu_custom_call.1} parent=31 // pred_check
          %p181 = pneg %p34
        $region34: #{tpu_custom_call.1} parent=31 // pred_check_branch
          %183 = sbr.rel (%p181) target = $region36
        $region35: #{tpu_custom_call.1} parent=31 // pred_region
          %s184 = smul.u32 32, %s14
          %s185 = ssub.s32 38, %s184
          %p186 = scmp.lt.s32.totalorder %s185, 32
          %s187 = scalar_select %p186, %s185, 32
          %s188 = smul.u32 128, %s187
          %p189 = scmp.lt.s32.totalorder %s184, 37
          %s190 = scalar_select %p189, %s184, 37
          %s191 = smul.addr %s190, 8
          %s192 = scalar_lea.vmem %s0, %s191
          %s193 = smul.u32 32, %s14
          %s194 = ssub.s32 38, %s193
          %p195 = scmp.lt.s32.totalorder %s194, 32
          %s196 = scalar_select %p195, %s194, 32
          %s197 = smul.u32 128, %s196
        $region36: #{tpu_custom_call.1} parent=31 // pred_fallthru
          _
      $region32: #{tpu_custom_call.1} parent=5 // pred_fallthru
        _
      %p198 = scmp.le.s32.totalorder 1, %s14
      %p199 = scmp.lt.s32.totalorder %s14, 3
      %p200 = pnand %p198, %p199
      %p201 = pneg %p200
      // Predicated region
      $region37: #{tpu_custom_call.1} parent=5 // pred_check
        _
      $region38: #{tpu_custom_call.1} parent=5 // pred_check_branch
        %203 = sbr.rel (%p200) target = $region40
      $region39: #{tpu_custom_call.1} parent=5 // pred_region
        %s204 = ssub.s32 %s14, 1
        %s205 = smul.u32 32, %s19
        %s206 = ssub.s32 38, %s205
        %p207 = scmp.lt.s32.totalorder %s206, 32
        %s208 = scalar_select %p207, %s206, 32
        %s209 = smul.u32 128, %s208
        %p210 = scmp.lt.s32.totalorder %s205, 37
        %s211 = scalar_select %p210, %s205, 37
        %s212 = smul.addr %s211, 8
        %s213 = scalar_lea.vmem %s0, %s212
        %p214 = pneg %p40
        %p215 = pneg %p37
        %p216 = pneg %p61
        %p217 = pneg %p58
        %p218 = pneg %p82
        %p219 = pneg %p79
        %p220 = pneg %p103
        %p221 = pneg %p100
        %p222 = pneg %p124
        %p223 = pneg %p121
        %p224 = pneg %p150
        %p225 = pneg %p147
        %s226 = sand.u32 %s137, 1
        %s227 = scalar_lea.sflag [#allocation3], %s226
        %s228 = sand.u32 %s137, 1
        %s229 = smul.addr %s228, 2
        %s230 = scalar_lea.vmem [#allocation2], %s229
        %s231 = smul.u32 32, %s19
        %s232 = ssub.s32 38, %s231
        %p233 = scmp.lt.s32.totalorder %s232, 32
        %s234 = scalar_select %p233, %s232, 32
        %s235 = smul.u32 128, %s234
        %p236 = scmp.lt.s32.totalorder %s231, 37
        %s237 = scalar_select %p236, %s231, 37
        %s238 = smul.addr %s237, 8
        %s239 = scalar_lea.vmem %s0, %s238
        %s240 = smul.u32 32, %s19
        %s241 = ssub.s32 38, %s240
        %p242 = scmp.lt.s32.totalorder %s241, 32
        %s243 = scalar_select %p242, %s241, 32
        %s244 = smul.u32 128, %s243
        %s245 = smul.u32 2, %s19
        %s246 = ssub.s32 3, %s245
        %p247 = scmp.lt.s32.totalorder %s246, 2
        %s248 = scalar_select %p247, %s246, 2
        %s249 = smul.u32 16, %s248
        %v250 = vld [vmem:[%s239] sm:$0xff]
        %v251 = vld [vmem:[%s239 + $0x8] sm:$0xff]
        %v252 = vld [vmem:[%s239 + $0x10] sm:$0xff]
        %v253 = vld [vmem:[%s239 + $0x18] sm:$0xff]
        %v254 = vld [vmem:[%s239 + $0x20] sm:$0xff]
        %v255 = vld [vmem:[%s239 + $0x28] sm:$0xff]
        %v256 = vld [vmem:[%s239 + $0x30] sm:$0xff]
        %v257 = vld [vmem:[%s239 + $0x38] sm:$0xff]
        %v258 = vld [vmem:[%s239 + $0x40] sm:$0xff]
        %v259 = vld [vmem:[%s239 + $0x48] sm:$0xff]
        %v260 = vld [vmem:[%s239 + $0x50] sm:$0xff]
        %v261 = vld [vmem:[%s239 + $0x58] sm:$0xff]
        %v262 = vld [vmem:[%s239 + $0x60] sm:$0xff]
        %v263 = vld [vmem:[%s239 + $0x68] sm:$0xff]
        %v264 = vld [vmem:[%s239 + $0x70] sm:$0xff]
        %v265 = vld [vmem:[%s239 + $0x78] sm:$0xff]
        %v266 = vld [vmem:[%s239 + $0x80] sm:$0xff]
        %v267 = vld [vmem:[%s239 + $0x88] sm:$0xff]
        %v268 = vld [vmem:[%s239 + $0x90] sm:$0xff]
        %v269 = vld [vmem:[%s239 + $0x98] sm:$0xff]
        %v270 = vld [vmem:[%s239 + $0xa0] sm:$0xff]
        %v271 = vld [vmem:[%s239 + $0xa8] sm:$0xff]
        %v272 = vld [vmem:[%s239 + $0xb0] sm:$0xff]
        %v273 = vld [vmem:[%s239 + $0xb8] sm:$0xff]
        %v274 = vld [vmem:[%s239 + $0xc0] sm:$0xff]
        %v275 = vld [vmem:[%s239 + $0xc8] sm:$0xff]
        %v276 = vld [vmem:[%s239 + $0xd0] sm:$0xff]
        %v277 = vld [vmem:[%s239 + $0xd8] sm:$0xff]
        %v278 = vld [vmem:[%s239 + $0xe0] sm:$0xff]
        %v279 = vld [vmem:[%s239 + $0xe8] sm:$0xff]
        %v280 = vld [vmem:[%s239 + $0xf0] sm:$0xff]
        %v281 = vld [vmem:[%s239 + $0xf8] sm:$0xff]
        %v282 = vld [vmem:[%s4] sm:$0xff]
        %v283 = vld [vmem:[%s4 + $0x8] sm:$0xff]
        %v284 = vld [vmem:[%s4 + $0x10] sm:$0xff]
        %v285 = vld [vmem:[%s4 + $0x18] sm:$0xff]
        %v286 = vld [vmem:[%s1] sm:$0xff]
        %v287 = vld [vmem:[%s1 + $0x8] sm:$0xff]
        %v288 = vld [vmem:[%s1 + $0x10] sm:$0xff]
        %v289 = vld [vmem:[%s1 + $0x18] sm:$0xff]
        %291 = vset.pattern.permute.xlu0 0
        %292 = vperm.xlu0 %291, %v282
        %v293 = vpop.permute.xlu0 %292
        %296 = vset.pattern.permute.xlu0 0
        %297 = vperm.xlu0 %296, %v283
        %v298 = vpop.permute.xlu0 %297
        %301 = vset.pattern.permute.xlu0 0
        %302 = vperm.xlu0 %301, %v284
        %v303 = vpop.permute.xlu0 %302
        %306 = vset.pattern.permute.xlu0 0
        %307 = vperm.xlu0 %306, %v285
        %v308 = vpop.permute.xlu0 %307
        %vm310 = vcmask 293888
        %v312 = vsel %vm310, %v286, 0
        %v315 = vsel %vm310, %v287, 0
        %v318 = vsel %vm310, %v288, 0
        %v321 = vsel %vm310, %v289, 0
        %v324 = vsel %vm310, %v250, 0
        %v327 = vsel %vm310, %v251, 0
        %v330 = vsel %vm310, %v252, 0
        %v333 = vsel %vm310, %v253, 0
        %v336 = vsel %vm310, %v254, 0
        %v339 = vsel %vm310, %v255, 0
        %v342 = vsel %vm310, %v256, 0
        %v345 = vsel %vm310, %v257, 0
        %v348 = vsel %vm310, %v258, 0
        %v351 = vsel %vm310, %v259, 0
        %v354 = vsel %vm310, %v260, 0
        %v357 = vsel %vm310, %v261, 0
        %v360 = vsel %vm310, %v262, 0
        %v363 = vsel %vm310, %v263, 0
        %v366 = vsel %vm310, %v264, 0
        %v369 = vsel %vm310, %v265, 0
        %v372 = vsel %vm310, %v266, 0
        %v375 = vsel %vm310, %v267, 0
        %v378 = vsel %vm310, %v268, 0
        %v381 = vsel %vm310, %v269, 0
        %v384 = vsel %vm310, %v270, 0
        %v387 = vsel %vm310, %v271, 0
        %v390 = vsel %vm310, %v272, 0
        %v393 = vsel %vm310, %v273, 0
        %v396 = vsel %vm310, %v274, 0
        %v399 = vsel %vm310, %v275, 0
        %v402 = vsel %vm310, %v276, 0
        %v405 = vsel %vm310, %v277, 0
        %v408 = vsel %vm310, %v278, 0
        %v411 = vsel %vm310, %v279, 0
        %v414 = vsel %vm310, %v280, 0
        %v417 = vsel %vm310, %v281, 0
        %419 = vmatprep.subr.mxu0 0.0
        %420 = vmatpush1.xpose.msra.mxu0 %v369
        %421 = vmatprep.subr.mxu0 0.0
        %422 = vmatpush1.xpose.msra.mxu0 %v366
        %423 = vmatprep.subr.mxu0 0.0
        %424 = vmatpush1.xpose.msra.mxu0 %v363
        %425 = vmatprep.subr.mxu0 0.0
        %426 = vmatpush1.xpose.msra.mxu0 %v360
        %427 = vmatprep.subr.mxu0 0.0
        %428 = vmatpush1.xpose.msra.mxu0 %v357
        %429 = vmatprep.subr.mxu0 0.0
        %430 = vmatpush1.xpose.msra.mxu0 %v354
        %431 = vmatprep.subr.mxu0 0.0
        %432 = vmatpush1.xpose.msra.mxu0 %v351
        %433 = vmatprep.subr.mxu0 0.0
        %434 = vmatpush1.xpose.msra.mxu0 %v348
        %435 = vmatprep.subr.mxu0 0.0
        %436 = vmatpush1.xpose.msra.mxu0 %v345
        %437 = vmatprep.subr.mxu0 0.0
        %438 = vmatpush1.xpose.msra.mxu0 %v342
        %439 = vmatprep.subr.mxu0 0.0
        %440 = vmatpush1.xpose.msra.mxu0 %v339
        %441 = vmatprep.subr.mxu0 0.0
        %442 = vmatpush1.xpose.msra.mxu0 %v336
        %443 = vmatprep.subr.mxu0 0.0
        %444 = vmatpush1.xpose.msra.mxu0 %v333
        %445 = vmatprep.subr.mxu0 0.0
        %446 = vmatpush1.xpose.msra.mxu0 %v330
        %447 = vmatprep.subr.mxu0 0.0
        %448 = vmatpush1.xpose.msra.mxu0 %v327
        %449 = vmatprep.subr.mxu0 0.0
        %450 = vmatpush1.xpose.msra.mxu0 %v324
        %451 = vmatprep.subr.mxu0 0.0
        %452 = vmatpush2.xpose.msra.mxu0 %v417
        %453 = vmatprep.subr.mxu0 0.0
        %454 = vmatpush2.xpose.msra.mxu0 %v414
        %455 = vmatprep.subr.mxu0 0.0
        %456 = vmatpush2.xpose.msra.mxu0 %v411
        %457 = vmatprep.subr.mxu0 0.0
        %458 = vmatpush2.xpose.msra.mxu0 %v408
        %459 = vmatprep.subr.mxu0 0.0
        %460 = vmatpush2.xpose.msra.mxu0 %v405
        %461 = vmatprep.subr.mxu0 0.0
        %462 = vmatpush2.xpose.msra.mxu0 %v402
        %463 = vmatprep.subr.mxu0 0.0
        %464 = vmatpush2.xpose.msra.mxu0 %v399
        %465 = vmatprep.subr.mxu0 0.0
        %466 = vmatpush2.xpose.msra.mxu0 %v396
        %467 = vmatprep.subr.mxu0 0.0
        %468 = vmatpush2.xpose.msra.mxu0 %v393
        %469 = vmatprep.subr.mxu0 0.0
        %470 = vmatpush2.xpose.msra.mxu0 %v390
        %471 = vmatprep.subr.mxu0 0.0
        %472 = vmatpush2.xpose.msra.mxu0 %v387
        %473 = vmatprep.subr.mxu0 0.0
        %474 = vmatpush2.xpose.msra.mxu0 %v384
        %475 = vmatprep.subr.mxu0 0.0
        %476 = vmatpush2.xpose.msra.mxu0 %v381
        %477 = vmatprep.subr.mxu0 0.0
        %478 = vmatpush2.xpose.msra.mxu0 %v378
        %479 = vmatprep.subr.mxu0 0.0
        %480 = vmatpush2.xpose.msra.mxu0 %v375
        %481 = vmatprep.subr.mxu0 0.0
        %482 = vmatpush2.xpose.msra.mxu0 %v372
        %483 = vmatprep.mubr.f32.mxu0 0.0
        %484 = vmatmul.mubr.f32.gmra.mxu0 %v312
        %v485 = vpop.f32.mrf.mxu0
        %v486 = vadd.f32 %v293, %v485
        %v487 = vpop.f32.mrf.mxu0
        %v488 = vadd.f32 %v293, %v487
        %489 = vmatprep.mubr.f32.mxu0 0.0
        %490 = vmatmul.mubr.f32.gmra.mxu0 %v315
        %v491 = vpop.f32.mrf.mxu0
        %v492 = vadd.f32 %v298, %v491
        %v493 = vpop.f32.mrf.mxu0
        %v494 = vadd.f32 %v298, %v493
        %495 = vmatprep.mubr.f32.mxu0 0.0
        %496 = vmatmul.mubr.f32.gmra.mxu0 %v318
        %v497 = vpop.f32.mrf.mxu0
        %v498 = vadd.f32 %v303, %v497
        %v499 = vpop.f32.mrf.mxu0
        %v500 = vadd.f32 %v303, %v499
        %501 = vmatprep.mubr.f32.mxu0 0.0
        %502 = vmatmul.mubr.f32.gmra.mxu0 %v321
        %v503 = vpop.f32.mrf.mxu0
        %v504 = vadd.f32 %v308, %v503
        %v505 = vpop.f32.mrf.mxu0
        %v506 = vadd.f32 %v308, %v505
        %507 = vdwg.mxu0
        %v508 = vtanh.pop %v486
        %v509 = vtanh.pop %v488
        %v510 = vtanh.pop %v492
        %v511 = vtanh.pop %v494
        %v512 = vtanh.pop %v498
        %v513 = vtanh.pop %v500
        %v514 = vtanh.pop %v504
        %v515 = vtanh.pop %v506
        %v516 = vld [vmem:[%s2] sm:$0xff]
        %v517 = vld [vmem:[%s2 + $0x8] sm:$0xff]
        %v518 = vld [vmem:[%s2 + $0x10] sm:$0xff]
        %v519 = vld [vmem:[%s2 + $0x18] sm:$0xff]
        %520 = vset.pattern.permute.xlu0 1
        %521 = vperm.xlu0 %520, %v282
        %v522 = vpop.permute.xlu0 %521
        %524 = vset.pattern.permute.xlu0 1
        %525 = vperm.xlu0 %524, %v283
        %v526 = vpop.permute.xlu0 %525
        %528 = vset.pattern.permute.xlu0 1
        %529 = vperm.xlu0 %528, %v284
        %v530 = vpop.permute.xlu0 %529
        %532 = vset.pattern.permute.xlu0 1
        %533 = vperm.xlu0 %532, %v285
        %v534 = vpop.permute.xlu0 %533
        %vm536 = vcmask 261120
        %v538 = vsel %vm536, %v516, 0
        %v541 = vsel %vm536, %v517, 0
        %v544 = vsel %vm536, %v518, 0
        %v547 = vsel %vm536, %v519, 0
        %549 = vmatprep.subr.mxu0 0.0
        %550 = vmatpush1.msra.mxu0 0.0
        %551 = vmatprep.subr.mxu0 0.0
        %552 = vmatpush1.msra.mxu0 0.0
        %553 = vmatprep.subr.mxu0 0.0
        %554 = vmatpush1.msra.mxu0 0.0
        %555 = vmatprep.subr.mxu0 0.0
        %556 = vmatpush1.msra.mxu0 0.0
        %557 = vmatprep.subr.mxu0 0.0
        %558 = vmatpush1.msra.mxu0 0.0
        %559 = vmatprep.subr.mxu0 0.0
        %560 = vmatpush1.msra.mxu0 0.0
        %561 = vmatprep.subr.mxu0 0.0
        %562 = vmatpush1.msra.mxu0 0.0
        %563 = vmatprep.subr.mxu0 0.0
        %564 = vmatpush1.msra.mxu0 0.0
        %565 = vmatprep.subr.mxu0 0.0
        %566 = vmatpush1.msra.mxu0 0.0
        %567 = vmatprep.subr.mxu0 0.0
        %568 = vmatpush1.msra.mxu0 0.0
        %569 = vmatprep.subr.mxu0 0.0
        %570 = vmatpush1.msra.mxu0 0.0
        %571 = vmatprep.subr.mxu0 0.0
        %572 = vmatpush1.msra.mxu0 0.0
        %573 = vmatprep.subr.mxu0 %v515
        %574 = vmatpush1.msra.mxu0 %v514
        %575 = vmatprep.subr.mxu0 %v513
        %576 = vmatpush1.msra.mxu0 %v512
        %577 = vmatprep.subr.mxu0 %v511
        %578 = vmatpush1.msra.mxu0 %v510
        %579 = vmatprep.subr.mxu0 %v509
        %580 = vmatpush1.msra.mxu0 %v508
        %581 = vmatprep.subr.mxu0 0.0
        %582 = vmatpush2.msra.mxu0 0.0
        %583 = vmatprep.subr.mxu0 0.0
        %584 = vmatpush2.msra.mxu0 0.0
        %585 = vmatprep.subr.mxu0 0.0
        %586 = vmatpush2.msra.mxu0 0.0
        %587 = vmatprep.subr.mxu0 0.0
        %588 = vmatpush2.msra.mxu0 0.0
        %589 = vmatprep.subr.mxu0 0.0
        %590 = vmatpush2.msra.mxu0 0.0
        %591 = vmatprep.subr.mxu0 0.0
        %592 = vmatpush2.msra.mxu0 0.0
        %593 = vmatprep.subr.mxu0 0.0
        %594 = vmatpush2.msra.mxu0 0.0
        %595 = vmatprep.subr.mxu0 0.0
        %596 = vmatpush2.msra.mxu0 0.0
        %597 = vmatprep.subr.mxu0 0.0
        %598 = vmatpush2.msra.mxu0 0.0
        %599 = vmatprep.subr.mxu0 0.0
        %600 = vmatpush2.msra.mxu0 0.0
        %601 = vmatprep.subr.mxu0 0.0
        %602 = vmatpush2.msra.mxu0 0.0
        %603 = vmatprep.subr.mxu0 0.0
        %604 = vmatpush2.msra.mxu0 0.0
        %605 = vmatprep.subr.mxu0 0.0
        %606 = vmatpush2.msra.mxu0 0.0
        %607 = vmatprep.subr.mxu0 0.0
        %608 = vmatpush2.msra.mxu0 0.0
        %609 = vmatprep.subr.mxu0 0.0
        %610 = vmatpush2.msra.mxu0 0.0
        %611 = vmatprep.subr.mxu0 0.0
        %612 = vmatpush2.msra.mxu0 0.0
        %613 = vmatprep.mubr.f32.mxu0 0.0
        %614 = vmatmul.mubr.f32.gmra.mxu0 %v538
        %v615 = vpop.f32.mrf.mxu0
        %v616 = vadd.f32 %v522, %v615
        %v617 = vpop.f32.mrf.mxu0
        %v618 = vadd.f32 %v522, %v617
        %619 = vmatprep.mubr.f32.mxu0 0.0
        %620 = vmatmul.mubr.f32.gmra.mxu0 %v541
        %v621 = vpop.f32.mrf.mxu0
        %v622 = vadd.f32 %v526, %v621
        %v623 = vpop.f32.mrf.mxu0
        %v624 = vadd.f32 %v526, %v623
        %625 = vmatprep.mubr.f32.mxu0 0.0
        %626 = vmatmul.mubr.f32.gmra.mxu0 %v544
        %v627 = vpop.f32.mrf.mxu0
        %v628 = vadd.f32 %v530, %v627
        %v629 = vpop.f32.mrf.mxu0
        %v630 = vadd.f32 %v530, %v629
        %631 = vmatprep.mubr.f32.mxu0 0.0
        %632 = vmatmul.mubr.f32.gmra.mxu0 %v547
        %v633 = vpop.f32.mrf.mxu0
        %v634 = vadd.f32 %v534, %v633
        %v635 = vpop.f32.mrf.mxu0
        %v636 = vadd.f32 %v534, %v635
        %637 = vdwg.mxu0
        %v638 = vtanh.pop %v616
        %v639 = vtanh.pop %v618
        %v640 = vtanh.pop %v622
        %v641 = vtanh.pop %v624
        %v642 = vtanh.pop %v628
        %v643 = vtanh.pop %v630
        %v644 = vtanh.pop %v634
        %v645 = vtanh.pop %v636
        %v646 = vld [vmem:[%s3] sm:$0xff]
        %v647 = vld [vmem:[%s3 + $0x8] sm:$0xff]
        %v648 = vld [vmem:[%s3 + $0x10] sm:$0xff]
        %v649 = vld [vmem:[%s3 + $0x18] sm:$0xff]
        %650 = vset.pattern.permute.xlu0 2
        %651 = vperm.xlu0 %650, %v282
        %v652 = vpop.permute.xlu0 %651
        %654 = vset.pattern.permute.xlu0 2
        %655 = vperm.xlu0 %654, %v283
        %v656 = vpop.permute.xlu0 %655
        %658 = vset.pattern.permute.xlu0 2
        %659 = vperm.xlu0 %658, %v284
        %v660 = vpop.permute.xlu0 %659
        %662 = vset.pattern.permute.xlu0 2
        %663 = vperm.xlu0 %662, %v285
        %v664 = vpop.permute.xlu0 %663
        %v667 = vsel %vm536, %v646, 0
        %v670 = vsel %vm536, %v647, 0
        %v673 = vsel %vm536, %v648, 0
        %v676 = vsel %vm536, %v649, 0
        %678 = vmatprep.subr.mxu0 0.0
        %679 = vmatpush1.msra.mxu0 0.0
        %680 = vmatprep.subr.mxu0 0.0
        %681 = vmatpush1.msra.mxu0 0.0
        %682 = vmatprep.subr.mxu0 0.0
        %683 = vmatpush1.msra.mxu0 0.0
        %684 = vmatprep.subr.mxu0 0.0
        %685 = vmatpush1.msra.mxu0 0.0
        %686 = vmatprep.subr.mxu0 0.0
        %687 = vmatpush1.msra.mxu0 0.0
        %688 = vmatprep.subr.mxu0 0.0
        %689 = vmatpush1.msra.mxu0 0.0
        %690 = vmatprep.subr.mxu0 0.0
        %691 = vmatpush1.msra.mxu0 0.0
        %692 = vmatprep.subr.mxu0 0.0
        %693 = vmatpush1.msra.mxu0 0.0
        %694 = vmatprep.subr.mxu0 0.0
        %695 = vmatpush1.msra.mxu0 0.0
        %696 = vmatprep.subr.mxu0 0.0
        %697 = vmatpush1.msra.mxu0 0.0
        %698 = vmatprep.subr.mxu0 0.0
        %699 = vmatpush1.msra.mxu0 0.0
        %700 = vmatprep.subr.mxu0 0.0
        %701 = vmatpush1.msra.mxu0 0.0
        %702 = vmatprep.subr.mxu0 %v645
        %703 = vmatpush1.msra.mxu0 %v644
        %704 = vmatprep.subr.mxu0 %v643
        %705 = vmatpush1.msra.mxu0 %v642
        %706 = vmatprep.subr.mxu0 %v641
        %707 = vmatpush1.msra.mxu0 %v640
        %708 = vmatprep.subr.mxu0 %v639
        %709 = vmatpush1.msra.mxu0 %v638
        %710 = vmatprep.subr.mxu0 0.0
        %711 = vmatpush2.msra.mxu0 0.0
        %712 = vmatprep.subr.mxu0 0.0
        %713 = vmatpush2.msra.mxu0 0.0
        %714 = vmatprep.subr.mxu0 0.0
        %715 = vmatpush2.msra.mxu0 0.0
        %716 = vmatprep.subr.mxu0 0.0
        %717 = vmatpush2.msra.mxu0 0.0
        %718 = vmatprep.subr.mxu0 0.0
        %719 = vmatpush2.msra.mxu0 0.0
        %720 = vmatprep.subr.mxu0 0.0
        %721 = vmatpush2.msra.mxu0 0.0
        %722 = vmatprep.subr.mxu0 0.0
        %723 = vmatpush2.msra.mxu0 0.0
        %724 = vmatprep.subr.mxu0 0.0
        %725 = vmatpush2.msra.mxu0 0.0
        %726 = vmatprep.subr.mxu0 0.0
        %727 = vmatpush2.msra.mxu0 0.0
        %728 = vmatprep.subr.mxu0 0.0
        %729 = vmatpush2.msra.mxu0 0.0
        %730 = vmatprep.subr.mxu0 0.0
        %731 = vmatpush2.msra.mxu0 0.0
        %732 = vmatprep.subr.mxu0 0.0
        %733 = vmatpush2.msra.mxu0 0.0
        %734 = vmatprep.subr.mxu0 0.0
        %735 = vmatpush2.msra.mxu0 0.0
        %736 = vmatprep.subr.mxu0 0.0
        %737 = vmatpush2.msra.mxu0 0.0
        %738 = vmatprep.subr.mxu0 0.0
        %739 = vmatpush2.msra.mxu0 0.0
        %740 = vmatprep.subr.mxu0 0.0
        %741 = vmatpush2.msra.mxu0 0.0
        %742 = vmatprep.mubr.f32.mxu0 0.0
        %743 = vmatmul.mubr.f32.gmra.mxu0 %v667
        %v744 = vpop.f32.mrf.mxu0
        %v745 = vadd.f32 %v652, %v744
        %v746 = vpop.f32.mrf.mxu0
        %v747 = vadd.f32 %v652, %v746
        %748 = vmatprep.mubr.f32.mxu0 0.0
        %749 = vmatmul.mubr.f32.gmra.mxu0 %v670
        %v750 = vpop.f32.mrf.mxu0
        %v751 = vadd.f32 %v656, %v750
        %v752 = vpop.f32.mrf.mxu0
        %v753 = vadd.f32 %v656, %v752
        %754 = vmatprep.mubr.f32.mxu0 0.0
        %755 = vmatmul.mubr.f32.gmra.mxu0 %v673
        %v756 = vpop.f32.mrf.mxu0
        %v757 = vadd.f32 %v660, %v756
        %v758 = vpop.f32.mrf.mxu0
        %v759 = vadd.f32 %v660, %v758
        %760 = vmatprep.mubr.f32.mxu0 0.0
        %761 = vmatmul.mubr.f32.gmra.mxu0 %v676
        %v762 = vpop.f32.mrf.mxu0
        %v763 = vadd.f32 %v664, %v762
        %v764 = vpop.f32.mrf.mxu0
        %v765 = vadd.f32 %v664, %v764
        %766 = vdwg.mxu0
        %v767 = vtanh.pop %v745
        %v768 = vtanh.pop %v747
        %v769 = vtanh.pop %v751
        %v770 = vtanh.pop %v753
        %v771 = vtanh.pop %v757
        %v772 = vtanh.pop %v759
        %v773 = vtanh.pop %v763
        %v774 = vtanh.pop %v765
        %775 = vset.pattern.permute.xlu0 3
        %776 = vperm.xlu0 %775, %v282
        %v777 = vpop.permute.xlu0 %776
        %779 = vset.pattern.permute.xlu0 3
        %780 = vperm.xlu0 %779, %v283
        %v781 = vpop.permute.xlu0 %780
        %783 = vset.pattern.permute.xlu0 3
        %784 = vperm.xlu0 %783, %v284
        %v785 = vpop.permute.xlu0 %784
        %787 = vset.pattern.permute.xlu0 3
        %788 = vperm.xlu0 %787, %v285
        %v789 = vpop.permute.xlu0 %788
        %v791 = vmul.f32 %v767, %v777
        %v792 = vmul.f32 %v768, %v777
        %v793 = vmul.f32 %v769, %v781
        %v794 = vmul.f32 %v770, %v781
        %v795 = vmul.f32 %v771, %v785
        %v796 = vmul.f32 %v772, %v785
        %v797 = vmul.f32 %v773, %v789
        %v798 = vmul.f32 %v774, %v789
        %v799 = vadd.f32 %v791, %v793
        %v800 = vadd.f32 %v799, %v795
        %v801 = vadd.f32 %v800, %v797
        %v802 = vrot.slane %v801, 4
        %v803 = vadd.f32 %v801, %v802
        %v804 = vrot.slane %v803, 2
        %v805 = vadd.f32 %v803, %v804
        %v806 = vrot.slane %v805, 1
        %v807 = vadd.f32 %v805, %v806
        %v808 = vadd.f32 %v792, %v794
        %v809 = vadd.f32 %v808, %v796
        %v810 = vadd.f32 %v809, %v798
        %v811 = vrot.slane %v810, 4
        %v812 = vadd.f32 %v810, %v811
        %v813 = vrot.slane %v812, 2
        %v814 = vadd.f32 %v812, %v813
        %v815 = vrot.slane %v814, 1
        %v816 = vadd.f32 %v814, %v815
        %v819 = vcombine.low %v807, %v816
        %v821 = vunpack.c.l.s4 1966171168
        %v822 = vunpack.c.0.s8 %v821
        %v823 = vlaneseq
        %v824 = vshrl.u32 %v823, 7
        %v825 = vsub.s32 %v822, %v824
        %v826 = vrot.slane %v819, %v825
        %v828 = vunpack.c.l.s4 1966171168
        %v829 = vunpack.c.0.s8 %v828
        %v830 = vlaneseq
        %v831 = vshrl.u32 %v830, 7
        %v832 = vsub.s32 %v829, %v831
        %v833 = vrot.slane %v826, %v832
        %v835 = vlaneseq
        %vm836 = vcmp.ge.s32.totalorder %v835, 0
        %vm837 = vcmp.lt.s32.totalorder %v835, 256
        %vm838 = vmand %vm836, %vm837
        %839 = vst.msk [vmem:[%s230] sm:$0x3] %vm838, %v833
        %s840 = sand.u32 %s137, 1
        %s841 = scalar_lea.sflag [#allocation3], %s840
        %s842 = sand.u32 %s137, 1
        %s843 = smul.addr %s842, 2
        %s844 = scalar_lea.vmem [#allocation2], %s843
        // Predicated region
        $region41: #{tpu_custom_call.1} parent=39 // pred_check
          %p845 = pneg %p147
        $region42: #{tpu_custom_call.1} parent=39 // pred_check_branch
          %847 = sbr.rel (%p845) target = $region44
        $region43: #{tpu_custom_call.1} parent=39 // pred_region
          %s848 = smul.u32 2, %s19
          %s849 = ssub.s32 3, %s848
          %p850 = scmp.lt.s32.totalorder %s849, 2
          %s851 = scalar_select %p850, %s849, 2
          %s852 = smul.u32 16, %s851
          %s854 = ssub.s32 32, %s852
          %855 = vsyncadd %s841, %s854
          %p856 = scmp.ne.s32.totalorder 0, %s852
          %s857 = smul.addr %s848, 16
          %s858 = scalar_lea.hbm %s5, %s857
          %s859 = sshll.u32 %s851, 4
          %s860 = sshll.u32 %s844, 4
          %s861 = int_to_ptr.vmem [resolvable:$true] %s860
          %863 = dma.vmem_to_hbm [thread:$0]  (%p856), %s861, %s859, %s858, %s841
        $region44: #{tpu_custom_call.1} parent=39 // pred_fallthru
          _
      $region40: #{tpu_custom_call.1} parent=5 // pred_fallthru
        _
      %p864 = scmp.le.s32.totalorder 2, %s14
      // Predicated region
      $region45: #{tpu_custom_call.1} parent=5 // pred_check
        %p865 = pneg %p864
      $region46: #{tpu_custom_call.1} parent=5 // pred_check_branch
        %867 = sbr.rel (%p865) target = $region48
      $region47: #{tpu_custom_call.1} parent=5 // pred_region
        %s868 = ssub.s32 %s14, 2
        // Predicated region
        $region49: #{tpu_custom_call.1} parent=47 // pred_check
          %p869 = pneg %p153
        $region50: #{tpu_custom_call.1} parent=47 // pred_check_branch
          %871 = sbr.rel (%p869) target = $region52
        $region51: #{tpu_custom_call.1} parent=47 // pred_region
          %s872 = sand.u32 %s138, 1
          %s873 = scalar_lea.sflag [#allocation3], %s872
          %s874 = sand.u32 %s138, 1
          %s875 = smul.addr %s874, 2
          %s876 = scalar_lea.vmem [#allocation2], %s875
          %877 = dma.done %s873, 32
        $region52: #{tpu_custom_call.1} parent=47 // pred_fallthru
          _
      $region48: #{tpu_custom_call.1} parent=5 // pred_fallthru
        _
    $region6: #{tpu_custom_call.1} parent=1 // loop_footer
      %s18 = sadd.s32 1, %s14
    $region7: #{tpu_custom_call.1} parent=1 // loop_footer_branch
      %13 = sbr.rel target = $region3
    $region8: #{tpu_custom_call.1} parent=1 // loop_exit
      _
    %878 = vsyncpa [#allocation3], 1
    %s879 = scalar_lea.sflag [#allocation3], 1
    %880 = vsyncpa %s879, 1

</llo_original>
